<compile_context>
chip_gen: v5e
topology: v5e:2x2
jax: 0.10.0
libtpu: 0.0.40
codegen_flags: <defaults>
</compile_context>

<pallas_src>
import math

import jax
import jax.numpy as jnp
from jax.experimental import pallas as pl
from jax.experimental.pallas import tpu as pltpu


def _dyt_kernel(alpha_ref, w_ref, b_ref, x_ref, o_ref):
    # alpha_ref: (1, 1) f32 in SMEM (scalar path).
    # w_ref, b_ref: (1, D) f32 in VMEM, resident across all grid steps.
    # x_ref, o_ref: (tile_rows, D) streaming tiles.
    alpha = alpha_ref[0, 0]
    x = x_ref[...].astype(jnp.float32)
    o_ref[...] = (jnp.tanh(alpha * x) * w_ref[...] + b_ref[...]).astype(o_ref.dtype)


def dyt(x, alpha, weight, bias, *, target_block_bytes=8 * 1024 * 1024):
    """DyT: tanh(alpha * x) * weight + bias, broadcast over the last axis."""
    orig_shape = x.shape
    dim = int(orig_shape[-1])
    x2 = x.reshape(-1, dim)
    rows = int(x2.shape[0])
    dtype = x2.dtype
    itemsize = jnp.dtype(dtype).itemsize

    # Parameters stay in f32 (resident cost is only 8*D bytes); alpha is f32 scalar.
    w_f32 = jnp.asarray(weight, dtype=jnp.float32).reshape(1, dim)
    b_f32 = jnp.asarray(bias, dtype=jnp.float32).reshape(1, dim)
    alpha2 = jnp.asarray(alpha, dtype=jnp.float32).reshape(1, 1)

    # Lane folding: make the last dim a multiple of 128 by folding rows into
    # the lane axis (pure reshape of x; weight/bias tiled to match).
    fold = 1
    if dim % 128 != 0:
        k = 128 // math.gcd(dim, 128)
        if k > 1 and rows % k == 0:
            fold = k
    D = dim * fold
    R = rows // fold
    if fold > 1:
        x2 = x2.reshape(R, D)
        w_f32 = jnp.tile(w_f32, (1, fold))
        b_f32 = jnp.tile(b_f32, (1, fold))
    # TODO(synk): when rows % fold != 0 we fall back to lane-masked stores
    # rather than padding (padding would add a full extra HBM pass).

    # Row tile: sublane-aligned, ~target_block_bytes per block, never (much)
    # larger than the row count.
    sub = max(8, 32 // itemsize)  # 8 rows/vreg f32, 16 bf16, 32 int8
    row_bytes = max(1, D * itemsize)
    tile_rows = max(sub, (target_block_bytes // row_bytes) // sub * sub)
    rows_ceil = -(-R // sub) * sub
    tile_rows = min(tile_rows, max(sub, rows_ceil))

    # Megacore (v7x): prefer >= 4 grid steps so both TensorCores stream, as
    # long as blocks stay >= ~1 MiB.
    num_tiles = pl.cdiv(R, tile_rows)
    if num_tiles < 4:
        rows_1mb = -(-(1 << 20) // row_bytes)
        min_rows_1mb = max(sub, -(-rows_1mb // sub) * sub)
        want = -(-R // 4)                 # ceil(R / 4)
        want = max(sub, -(-want // sub) * sub)
        new_tile = max(min_rows_1mb, want)
        if new_tile < tile_rows:
            tile_rows = new_tile
            num_tiles = pl.cdiv(R, tile_rows)

    block_bytes = tile_rows * D * itemsize

    # Chip-aware VMEM limit: double-buffered in + out blocks plus resident
    # params with headroom, capped at ~75% of physical VMEM.
    try:
        vmem_cap = int(getattr(pltpu.get_tpu_info(), "vmem_capacity_bytes",
                               64 * 2**20))
    except Exception:  # pragma: no cover - conservative fallback
        vmem_cap = 64 * 2**20
    vmem_limit = int(min(int(0.75 * vmem_cap), max(32 * 2**20, 6 * block_bytes)))

    cost = pl.CostEstimate(
        flops=3 * rows * dim,
        transcendentals=rows * dim,
        bytes_accessed=2 * rows * dim * itemsize + 8 * dim + 4,
    )

    out2 = pl.pallas_call(
        _dyt_kernel,
        out_shape=jax.ShapeDtypeStruct((R, D), dtype),
        grid=(num_tiles,),
        in_specs=[
            pl.BlockSpec(memory_space=pltpu.SMEM),             # alpha (1, 1)
            pl.BlockSpec((1, D), lambda i: (0, 0)),            # weight (resident)
            pl.BlockSpec((1, D), lambda i: (0, 0)),            # bias   (resident)
            pl.BlockSpec((tile_rows, D), lambda i: (i, 0)),    # x tile
        ],
        out_specs=pl.BlockSpec((tile_rows, D), lambda i: (i, 0)),
        compiler_params=pltpu.CompilerParams(
            dimension_semantics=("parallel",),
            vmem_limit_bytes=vmem_limit,
        ),
        cost_estimate=cost,
    )(alpha2, w_f32, b_f32, x2)

    return out2.reshape(orig_shape)


if __name__ == "__main__":
    key = jax.random.PRNGKey(0)
    batch, seq, hidden = 2, 8, 32
    kx, kw, kb = jax.random.split(key, 3)

    x = jax.random.normal(kx, (batch, seq, hidden), dtype=jnp.float32)

    # Deterministic parameter init matching DyT.__init__:
    alpha_init_value = 0.5
    alpha = jnp.ones((1,), dtype=jnp.float32) * alpha_init_value
    weight = jnp.ones((hidden,), dtype=jnp.float32)
    bias = jnp.zeros((hidden,), dtype=jnp.float32)

    out = dyt(x, alpha, weight, bias)
    out = jax.block_until_ready(out)
    ref = jnp.tanh(alpha[0] * x) * weight + bias
    assert out.shape == x.shape
    assert jnp.allclose(out, ref, atol=1e-6, rtol=1e-6)

    # Non-trivial params to exercise the lane-folded weight/bias broadcast.
    weight2 = jax.random.normal(kw, (hidden,), dtype=jnp.float32)
    bias2 = jax.random.normal(kb, (hidden,), dtype=jnp.float32)
    out2 = jax.block_until_ready(dyt(x, alpha, weight2, bias2))
    ref2 = jnp.tanh(alpha[0] * x) * weight2 + bias2
    assert jnp.allclose(out2, ref2, atol=1e-6, rtol=1e-6)

    print("KERNEL_OK")
</pallas_src>

<mosaic_0001>
module attributes {stable_mosaic.version = 11 : i64} {
  func.func @_dyt_kernel(%arg0: i32, %arg1: memref<1x1xf32, #tpu.memory_space<smem>>, %arg2: memref<1x128xf32, #tpu.memory_space<vmem>>, %arg3: memref<1x128xf32, #tpu.memory_space<vmem>>, %arg4: memref<8x128xf32, #tpu.memory_space<vmem>>, %arg5: memref<8x128xf32, #tpu.memory_space<vmem>>) attributes {dimension_semantics = [#tpu.dimension_semantics<parallel>], iteration_bounds = array<i64: 1>, scalar_prefetch = 0 : i64, scratch_operands = 0 : i64, tpu.core_type = #tpu.core_type<tc>, window_params = [{transform_indices = @transform_0, window_bounds = array<i64: 1, 1>}, {pipeline_mode = #tpu.pipeline_mode<synchronous>, transform_indices = @transform_1, window_bounds = array<i64: 1, 128>}, {pipeline_mode = #tpu.pipeline_mode<synchronous>, transform_indices = @transform_2, window_bounds = array<i64: 1, 128>}, {transform_indices = @transform_3, window_bounds = array<i64: 8, 128>}, {transform_indices = @transform_4, window_bounds = array<i64: 8, 128>}]} {
    %c0 = arith.constant 0 : index
    %c0_0 = arith.constant 0 : index
    %0 = memref.load %arg1[%c0, %c0_0] : memref<1x1xf32, #tpu.memory_space<smem>>
    %c0_1 = arith.constant 0 : index
    %c0_2 = arith.constant 0 : index
    %1 = vector.load %arg4[%c0_1, %c0_2] : memref<8x128xf32, #tpu.memory_space<vmem>>, vector<8x128xf32>
    %2 = vector.broadcast %0 : f32 to vector<8x128xf32>
    %3 = arith.mulf %2, %1 : vector<8x128xf32>
    %4 = math.tanh %3 : vector<8x128xf32>
    %c0_3 = arith.constant 0 : index
    %c0_4 = arith.constant 0 : index
    %5 = vector.load %arg2[%c0_3, %c0_4] : memref<1x128xf32, #tpu.memory_space<vmem>>, vector<1x128xf32>
    %6 = vector.broadcast %5 : vector<1x128xf32> to vector<8x128xf32>
    %7 = arith.mulf %4, %6 : vector<8x128xf32>
    %c0_5 = arith.constant 0 : index
    %c0_6 = arith.constant 0 : index
    %8 = vector.load %arg3[%c0_5, %c0_6] : memref<1x128xf32, #tpu.memory_space<vmem>>, vector<1x128xf32>
    %9 = vector.broadcast %8 : vector<1x128xf32> to vector<8x128xf32>
    %10 = arith.addf %7, %9 : vector<8x128xf32>
    %c0_7 = arith.constant 0 : index
    %c0_8 = arith.constant 0 : index
    %11 = vector.load %arg5[%c0_7, %c0_8] : memref<8x128xf32, #tpu.memory_space<vmem>>, vector<8x128xf32>
    tpu.vector_store %arg5[%c0_7, %c0_8], %10 {strides = array<i32>} : memref<8x128xf32, #tpu.memory_space<vmem>>, vector<8x128xf32>,
    return
  }
  func.func @transform_0(%arg0: i32) -> (i32, i32) {
    %c0_i32 = arith.constant 0 : i32
    %c0_i32_0 = arith.constant 0 : i32
    %c0_i32_1 = arith.constant 0 : i32
    return %c0_i32, %c0_i32_0 : i32, i32
  }
  func.func @transform_1(%arg0: i32) -> (i32, i32) {
    %c0_i32 = arith.constant 0 : i32
    %c0_i32_0 = arith.constant 0 : i32
    %c0_i32_1 = arith.constant 0 : i32
    return %c0_i32, %c0_i32_0 : i32, i32
  }
  func.func @transform_2(%arg0: i32) -> (i32, i32) {
    %c0_i32 = arith.constant 0 : i32
    %c0_i32_0 = arith.constant 0 : i32
    %c0_i32_1 = arith.constant 0 : i32
    return %c0_i32, %c0_i32_0 : i32, i32
  }
  func.func @transform_3(%arg0: i32) -> (i32, i32) {
    %c0_i32 = arith.constant 0 : i32
    %c0_i32_0 = arith.constant 0 : i32
    return %arg0, %c0_i32 : i32, i32
  }
  func.func @transform_4(%arg0: i32) -> (i32, i32) {
    %c0_i32 = arith.constant 0 : i32
    %c0_i32_0 = arith.constant 0 : i32
    return %arg0, %c0_i32 : i32, i32
  }
}

</mosaic_0001>

<llo_original>
// kernel: tpu_custom_call.1
$region0: #{tpu_custom_call.1}
  #allocation0 [shape = 'u32[]', space=smem, size = 0x4, offset = 0x4, fixed_abs, tag = 'smem constant byte address 0x4 - core index']
  #allocation1 [shape = 'u32[72,128]{1,0:T(1,128)}', space=vmem, size = 0x9000, scoped, tag = 'internal scratch']
  #allocation2 [shape = 'f32[1,1]{1,0:T(1,128)S(6)}', space=smem, size = 0x200, scoped, tag = 'scoped memory for tpu_custom_call.1']
  %s0 = inlined_call_operand.<no memory space> [shape: f32[1,1], index: 0, kind: input, shape index: {}]
  %s1 = inlined_call_operand.vmem [shape: f32[1,128], index: 1, kind: input, shape index: {}]
  %s2 = inlined_call_operand.vmem [shape: f32[1,128], index: 2, kind: input, shape index: {}]
  %s3 = inlined_call_operand.hbm [shape: f32[4,128], index: 3, kind: input, shape index: {}]
  %s4 = inlined_call_operand.hbm [shape: f32[4,128], index: 4, kind: output, shape index: {}]
  %s5 = sld [smem:[#allocation0]]
  $region30: #{tpu_custom_call.1} parent=0
    _
  %s7 = ssub.s32 1, %s5
  %s8 = scalar_select 0, %s7, %s5
  %9 = sst [smem:[#allocation2]] %s0
  $region1: #{tpu_custom_call.1} parent=0
    #allocation3 [shape = 'u8[4096]{0}', space=vmem, size = 0x1000, scoped, tag = 'input window, operand 3, single buffered']
    #allocation4 [shape = 's32[1]{0}', space=sflag, size = 0x4, scoped, tag = 'scoped memory for tpu_custom_call.1']
    #allocation5 [shape = 's32[1]{0}', space=sflag, size = 0x4, scoped, tag = 'scoped memory for tpu_custom_call.1']
    #allocation6 [shape = 'u8[4096]{0}', space=vmem, size = 0x1000, scoped, tag = 'output window, operand 0, single buffered']
    %10 = vsyncpa [#allocation4], 0
    %11 = vsyncpa [#allocation5], 0
    // Predicated region
    $region2: #{tpu_custom_call.1} parent=1 // pred_check
      _
    $region3: #{tpu_custom_call.1} parent=1 // pred_check_branch
      %13 = sbr.rel (0) target = $region5
    $region4: #{tpu_custom_call.1} parent=1 // pred_region
      _
    $region5: #{tpu_custom_call.1} parent=1 // pred_fallthru
      _
    // Predicated region
    $region6: #{tpu_custom_call.1} parent=1 // pred_check
      _
    $region7: #{tpu_custom_call.1} parent=1 // pred_check_branch
      %15 = sbr.rel (0) target = $region9
    $region8: #{tpu_custom_call.1} parent=1 // pred_region
      _
    $region9: #{tpu_custom_call.1} parent=1 // pred_fallthru
      _
    // Predicated region
    $region10: #{tpu_custom_call.1} parent=1 // pred_check
      _
    $region11: #{tpu_custom_call.1} parent=1 // pred_check_branch
      %17 = sbr.rel (0) target = $region13
    $region12: #{tpu_custom_call.1} parent=1 // pred_region
      _
    $region13: #{tpu_custom_call.1} parent=1 // pred_fallthru
      _
    // Predicated region
    $region14: #{tpu_custom_call.1} parent=1 // pred_check
      _
    $region15: #{tpu_custom_call.1} parent=1 // pred_check_branch
      %19 = sbr.rel (0) target = $region17
    $region16: #{tpu_custom_call.1} parent=1 // pred_region
      %21 = vsyncadd [#allocation4], 64
      %s22 = sshll.u32 %s3, 4
      %s23 = int_to_ptr.hbm [resolvable:$true] %s22
      %s24 = sshll.u32 [#allocation3], 4
      %s25 = int_to_ptr.vmem [resolvable:$true] %s24
      %30 = dma.hbm_to_vmem [thread:$0]  %s23, 64, %s25, [#allocation4], 64, 64, 4
    $region17: #{tpu_custom_call.1} parent=1 // pred_fallthru
      _
    // Predicated region
    $region18: #{tpu_custom_call.1} parent=1 // pred_check
      _
    $region19: #{tpu_custom_call.1} parent=1 // pred_check_branch
      %32 = sbr.rel (0) target = $region21
    $region20: #{tpu_custom_call.1} parent=1 // pred_region
      %34 = dma.done [#allocation4], 128
    $region21: #{tpu_custom_call.1} parent=1 // pred_fallthru
      _
    %s35 = sld [smem:[#allocation2]]
    %v36 = vld [vmem:[#allocation3] sm:$0xff]
    %v37 = vstv %s35
    %v38 = vmul.f32 %v37, %v36
    %v39 = vtanh.pop %v38
    %v40 = vld [vmem:[%s1] sm:$0x1]
    %v42 = vperm.slane %v40, 0
    %v44 = vmul.f32 %v39, %v42
    %v45 = vld [vmem:[%s2] sm:$0x1]
    %v47 = vperm.slane %v45, 0
    %v49 = vadd.f32 %v44, %v47
    %50 = vst [vmem:[#allocation6] sm:$0xff] %v49
    // Predicated region
    $region22: #{tpu_custom_call.1} parent=1 // pred_check
      _
    $region23: #{tpu_custom_call.1} parent=1 // pred_check_branch
      %52 = sbr.rel (0) target = $region25
    $region24: #{tpu_custom_call.1} parent=1 // pred_region
      %54 = vsyncadd [#allocation5], 64
      %s55 = sshll.u32 [#allocation6], 4
      %s56 = int_to_ptr.vmem [resolvable:$true] %s55
      %s57 = sshll.u32 %s4, 4
      %s58 = int_to_ptr.hbm [resolvable:$true] %s57
      %63 = dma.vmem_to_hbm [thread:$0]  %s56, 64, %s58, [#allocation5], 64, 64, 4
    $region25: #{tpu_custom_call.1} parent=1 // pred_fallthru
      _
    // Predicated region
    $region26: #{tpu_custom_call.1} parent=1 // pred_check
      _
    $region27: #{tpu_custom_call.1} parent=1 // pred_check_branch
      %65 = sbr.rel (0) target = $region29
    $region28: #{tpu_custom_call.1} parent=1 // pred_region
      %67 = dma.done [#allocation5], 128
    $region29: #{tpu_custom_call.1} parent=1 // pred_fallthru
      _
    %68 = vsyncpa [#allocation4], 1
    %69 = vsyncpa [#allocation5], 1

</llo_original>
